<compile_context>
chip_gen: v5e
topology: v5e:2x2
jax: 0.10.0
libtpu: 0.0.40
codegen_flags: <defaults>
</compile_context>

<pallas_src>
import math
import functools

import jax
import jax.numpy as jnp
from jax.experimental import pallas as pl
from jax.experimental.pallas import tpu as pltpu


def _round_up(v, m):
    return ((v + m - 1) // m) * m


def _fusion_kernel(x_ref, c_ref, t_ref,
                   wx_ref, wc_ref, wt_ref, b_ref,
                   o_ref, *, n_pad):
    # One wide accumulation: pre[:, 0:N] = x@W1, pre[:, N:2N] = ctx@W2,
    # pre[:, 2N:3N] = in1@Wg  (the concat is realized via the row-split,
    # zero-padded packed weights).  All three dots accumulate in f32 on MXU.
    pre = jnp.dot(x_ref[...], wx_ref[...], preferred_element_type=jnp.float32)
    pre = pre + jnp.dot(c_ref[...], wc_ref[...],
                        preferred_element_type=jnp.float32)
    pre = pre + jnp.dot(t_ref[...], wt_ref[...],
                        preferred_element_type=jnp.float32)
    pre = pre + b_ref[...]

    h1 = pre[:, :n_pad]
    h2 = pre[:, n_pad:2 * n_pad]
    gate = jax.nn.sigmoid(pre[:, 2 * n_pad:])          # EUP slot, f32
    out = h2 + (h1 - h2) * gate                        # == h1*g + h2*(1-g)
    o_ref[...] = out.astype(o_ref.dtype)


def adaptive_fusion(ctx, x, timeemb, params, *, row_tile=512):
    """ctx: [..., dim_ctx], x: [..., dim_in], timeemb: [..., dim_time]."""
    assert ctx.shape[:-1] == x.shape[:-1] == timeemb.shape[:-1]
    lead = x.shape[:-1]
    dim_in = x.shape[-1]
    dim_ctx = ctx.shape[-1]
    dim_time = timeemb.shape[-1]
    dim_out = params["w1"].shape[1]
    dtype = x.dtype

    # ---- pack weights once: W_big columns are [h1 | h2 | g_pre], N padded to 128
    n_pad = _round_up(dim_out, 128)

    def pad_n(w):
        return jnp.pad(w, ((0, 0), (0, n_pad - dim_out)))

    wg = params["wg"]                                   # rows ordered [x; ctx; time]
    wg_x = wg[:dim_in]
    wg_c = wg[dim_in:dim_in + dim_ctx]
    wg_t = wg[dim_in + dim_ctx:]

    zx = jnp.zeros((dim_in, n_pad), dtype)
    zc = jnp.zeros((dim_ctx, n_pad), dtype)
    zt = jnp.zeros((dim_time, 2 * n_pad), dtype)

    wx_big = jnp.concatenate([pad_n(params["w1"]), zx, pad_n(wg_x)], axis=1)  # [dim_in, 3N]
    wc_big = jnp.concatenate([zc, pad_n(params["w2"]), pad_n(wg_c)], axis=1)  # [dim_ctx, 3N]
    wt_big = jnp.concatenate([zt, pad_n(wg_t)], axis=1)                        # [dim_time, 3N]
    b_big = jnp.concatenate(
        [pad_n(params["b1"]), pad_n(params["b2"]), pad_n(params["bg"])], axis=1)  # [1, 3N]

    # ---- flatten leading dims, pad rows to a row_tile multiple (ragged M)
    M = int(math.prod(lead)) if lead else 1
    rt = _round_up(max(8, min(row_tile, _round_up(M, 8))), 8)
    grid_m = pl.cdiv(M, rt)
    m_pad = grid_m * rt

    def to_rows(a, f):
        a2 = a.reshape(M, f)
        if m_pad > M:
            a2 = jnp.pad(a2, ((0, m_pad - M), (0, 0)))
        return a2

    x2 = to_rows(x, dim_in)
    c2 = to_rows(ctx, dim_ctx)
    t2 = to_rows(timeemb, dim_time)

    row_spec = lambda f: pl.BlockSpec((rt, f), lambda i: (i, 0))
    full_spec = lambda r, c: pl.BlockSpec((r, c), lambda i: (0, 0))

    out_pad = pl.pallas_call(
        functools.partial(_fusion_kernel, n_pad=n_pad),
        out_shape=jax.ShapeDtypeStruct((m_pad, n_pad), dtype),
        grid_spec=pltpu.PrefetchScalarGridSpec(
            num_scalar_prefetch=0,
            grid=(grid_m,),
            in_specs=[
                row_spec(dim_in),                 # x rows
                row_spec(dim_ctx),                # ctx rows
                row_spec(dim_time),               # timeemb rows
                full_spec(dim_in, 3 * n_pad),     # packed Wx
                full_spec(dim_ctx, 3 * n_pad),    # packed Wc
                full_spec(dim_time, 3 * n_pad),   # packed Wt
                full_spec(1, 3 * n_pad),          # packed bias
            ],
            out_specs=pl.BlockSpec((rt, n_pad), lambda i: (i, 0)),
        ),
        compiler_params=pltpu.CompilerParams(
            dimension_semantics=("parallel",)),
    )(x2, c2, t2, wx_big, wc_big, wt_big, b_big)

    return out_pad[:M, :dim_out].reshape(*lead, dim_out)


def init_params(key, dim_in, dim_out, dim_ctx, dim_time=3, dtype=jnp.float32):
    """Deterministic init mimicking torch.nn.Linear (U(-1/sqrt(fan_in), +))."""
    def linear(k, fan_in, fan_out):
        kw, kb = jax.random.split(k)
        bound = 1.0 / math.sqrt(fan_in)
        # stored as [fan_in, fan_out] so the kernel does x @ W (== x @ W_torch.T)
        w = jax.random.uniform(kw, (fan_in, fan_out), dtype, -bound, bound)
        b = jax.random.uniform(kb, (1, fan_out), dtype, -bound, bound)
        return w, b

    k1, k2, k3 = jax.random.split(key, 3)
    w1, b1 = linear(k1, dim_in, dim_out)
    w2, b2 = linear(k2, dim_ctx, dim_out)
    wg, bg = linear(k3, dim_time + dim_ctx + dim_in, dim_out)
    return {"w1": w1, "b1": b1, "w2": w2, "b2": b2, "wg": wg, "bg": bg}


def reference(ctx, x, timeemb, p):
    in1 = jnp.concatenate([x, ctx, timeemb], axis=-1)
    gate1 = jax.nn.sigmoid(in1 @ p["wg"] + p["bg"][0])
    return (x @ p["w1"] + p["b1"][0]) * gate1 + \
           (ctx @ p["w2"] + p["b2"][0]) * (1.0 - gate1)


if __name__ == "__main__":
    # Small shapes consistent with the module's forward.
    B, S = 2, 8                    # leading dims (batch, seq)
    dim_in, dim_ctx, dim_out, dim_time = 16, 8, 32, 3

    key = jax.random.PRNGKey(0)
    kp, kx, kc, kt = jax.random.split(key, 4)

    params = init_params(kp, dim_in, dim_out, dim_ctx, dim_time)
    x = jax.random.normal(kx, (B, S, dim_in), jnp.float32)
    ctx = jax.random.normal(kc, (B, S, dim_ctx), jnp.float32)
    timeemb = jax.random.normal(kt, (B, S, dim_time), jnp.float32)

    out = adaptive_fusion(ctx, x, timeemb, params)
    out = jax.block_until_ready(out)

    ref = reference(ctx, x, timeemb, params)
    assert out.shape == (B, S, dim_out)
    assert jnp.allclose(out, ref, atol=1e-5, rtol=1e-5), "mismatch vs reference"

    print("KERNEL_OK")
</pallas_src>

<mosaic_0001>
module attributes {stable_mosaic.version = 11 : i64} {
  func.func @_fusion_kernel(%arg0: i32, %arg1: memref<16x16xf32, #tpu.memory_space<vmem>>, %arg2: memref<16x8xf32, #tpu.memory_space<vmem>>, %arg3: memref<16x3xf32, #tpu.memory_space<vmem>>, %arg4: memref<16x384xf32, #tpu.memory_space<vmem>>, %arg5: memref<8x384xf32, #tpu.memory_space<vmem>>, %arg6: memref<3x384xf32, #tpu.memory_space<vmem>>, %arg7: memref<1x384xf32, #tpu.memory_space<vmem>>, %arg8: memref<16x128xf32, #tpu.memory_space<vmem>>) attributes {dimension_semantics = [#tpu.dimension_semantics<parallel>], iteration_bounds = array<i64: 1>, scalar_prefetch = 0 : i64, scratch_operands = 0 : i64, tpu.core_type = #tpu.core_type<tc>, window_params = [{transform_indices = @transform_0, window_bounds = array<i64: 16, 16>}, {transform_indices = @transform_1, window_bounds = array<i64: 16, 8>}, {transform_indices = @transform_2, window_bounds = array<i64: 16, 3>}, {pipeline_mode = #tpu.pipeline_mode<synchronous>, transform_indices = @transform_3, window_bounds = array<i64: 16, 384>}, {pipeline_mode = #tpu.pipeline_mode<synchronous>, transform_indices = @transform_4, window_bounds = array<i64: 8, 384>}, {pipeline_mode = #tpu.pipeline_mode<synchronous>, transform_indices = @transform_5, window_bounds = array<i64: 3, 384>}, {pipeline_mode = #tpu.pipeline_mode<synchronous>, transform_indices = @transform_6, window_bounds = array<i64: 1, 384>}, {transform_indices = @transform_7, window_bounds = array<i64: 16, 128>}]} {
    %c0 = arith.constant 0 : index
    %c0_0 = arith.constant 0 : index
    %0 = vector.load %arg1[%c0, %c0_0] : memref<16x16xf32, #tpu.memory_space<vmem>>, vector<16x16xf32>
    %c0_1 = arith.constant 0 : index
    %c0_2 = arith.constant 0 : index
    %1 = vector.load %arg4[%c0_1, %c0_2] : memref<16x384xf32, #tpu.memory_space<vmem>>, vector<16x384xf32>
    %cst = arith.constant dense<0.000000e+00> : vector<16x384xf32>
    %2 = tpu.matmul %0, %1, %cst {dimension_numbers = #tpu.dot_dimension_numbers<[1], [0], [0], [1], [0, 0, 1, 1], [], []>} : vector<16x16xf32>, vector<16x384xf32>, vector<16x384xf32> -> vector<16x384xf32>
    %c0_3 = arith.constant 0 : index
    %c0_4 = arith.constant 0 : index
    %3 = vector.load %arg2[%c0_3, %c0_4] : memref<16x8xf32, #tpu.memory_space<vmem>>, vector<16x8xf32>
    %c0_5 = arith.constant 0 : index
    %c0_6 = arith.constant 0 : index
    %4 = vector.load %arg5[%c0_5, %c0_6] : memref<8x384xf32, #tpu.memory_space<vmem>>, vector<8x384xf32>
    %cst_7 = arith.constant dense<0.000000e+00> : vector<16x384xf32>
    %5 = tpu.matmul %3, %4, %cst_7 {dimension_numbers = #tpu.dot_dimension_numbers<[1], [0], [0], [1], [0, 0, 1, 1], [], []>} : vector<16x8xf32>, vector<8x384xf32>, vector<16x384xf32> -> vector<16x384xf32>
    %6 = arith.addf %2, %5 : vector<16x384xf32>
    %c0_8 = arith.constant 0 : index
    %c0_9 = arith.constant 0 : index
    %7 = vector.load %arg3[%c0_8, %c0_9] : memref<16x3xf32, #tpu.memory_space<vmem>>, vector<16x3xf32>
    %c0_10 = arith.constant 0 : index
    %c0_11 = arith.constant 0 : index
    %8 = vector.load %arg6[%c0_10, %c0_11] : memref<3x384xf32, #tpu.memory_space<vmem>>, vector<3x384xf32>
    %cst_12 = arith.constant dense<0.000000e+00> : vector<16x384xf32>
    %9 = tpu.matmul %7, %8, %cst_12 {dimension_numbers = #tpu.dot_dimension_numbers<[1], [0], [0], [1], [0, 0, 1, 1], [], []>} : vector<16x3xf32>, vector<3x384xf32>, vector<16x384xf32> -> vector<16x384xf32>
    %10 = arith.addf %6, %9 : vector<16x384xf32>
    %c0_13 = arith.constant 0 : index
    %c0_14 = arith.constant 0 : index
    %11 = vector.load %arg7[%c0_13, %c0_14] : memref<1x384xf32, #tpu.memory_space<vmem>>, vector<1x384xf32>
    %12 = vector.broadcast %11 : vector<1x384xf32> to vector<16x384xf32>
    %13 = arith.addf %10, %12 : vector<16x384xf32>
    %14 = vector.extract_strided_slice %13 {offsets = [0, 0], sizes = [16, 128], strides = [1, 1]} : vector<16x384xf32> to vector<16x128xf32>
    %15 = vector.extract_strided_slice %13 {offsets = [0, 128], sizes = [16, 128], strides = [1, 1]} : vector<16x384xf32> to vector<16x128xf32>
    %16 = vector.extract_strided_slice %13 {offsets = [0, 256], sizes = [16, 128], strides = [1, 1]} : vector<16x384xf32> to vector<16x128xf32>
    %17 = arith.negf %16 : vector<16x128xf32>
    %18 = math.exp %17 : vector<16x128xf32>
    %cst_15 = arith.constant 1.000000e+00 : f32
    %19 = vector.broadcast %cst_15 : f32 to vector<16x128xf32>
    %20 = arith.addf %19, %18 : vector<16x128xf32>
    %21 = arith.divf %19, %20 : vector<16x128xf32>
    %22 = arith.subf %14, %15 : vector<16x128xf32>
    %23 = arith.mulf %22, %21 : vector<16x128xf32>
    %24 = arith.addf %15, %23 : vector<16x128xf32>
    %c0_16 = arith.constant 0 : index
    %c0_17 = arith.constant 0 : index
    %25 = vector.load %arg8[%c0_16, %c0_17] : memref<16x128xf32, #tpu.memory_space<vmem>>, vector<16x128xf32>
    tpu.vector_store %arg8[%c0_16, %c0_17], %24 {strides = array<i32>} : memref<16x128xf32, #tpu.memory_space<vmem>>, vector<16x128xf32>,
    return
  }
  func.func @transform_0(%arg0: i32) -> (i32, i32) {
    %c0_i32 = arith.constant 0 : i32
    %c0_i32_0 = arith.constant 0 : i32
    return %arg0, %c0_i32 : i32, i32
  }
  func.func @transform_1(%arg0: i32) -> (i32, i32) {
    %c0_i32 = arith.constant 0 : i32
    %c0_i32_0 = arith.constant 0 : i32
    return %arg0, %c0_i32 : i32, i32
  }
  func.func @transform_2(%arg0: i32) -> (i32, i32) {
    %c0_i32 = arith.constant 0 : i32
    %c0_i32_0 = arith.constant 0 : i32
    return %arg0, %c0_i32 : i32, i32
  }
  func.func @transform_3(%arg0: i32) -> (i32, i32) {
    %c0_i32 = arith.constant 0 : i32
    %c0_i32_0 = arith.constant 0 : i32
    %c0_i32_1 = arith.constant 0 : i32
    return %c0_i32, %c0_i32_0 : i32, i32
  }
  func.func @transform_4(%arg0: i32) -> (i32, i32) {
    %c0_i32 = arith.constant 0 : i32
    %c0_i32_0 = arith.constant 0 : i32
    %c0_i32_1 = arith.constant 0 : i32
    return %c0_i32, %c0_i32_0 : i32, i32
  }
  func.func @transform_5(%arg0: i32) -> (i32, i32) {
    %c0_i32 = arith.constant 0 : i32
    %c0_i32_0 = arith.constant 0 : i32
    %c0_i32_1 = arith.constant 0 : i32
    return %c0_i32, %c0_i32_0 : i32, i32
  }
  func.func @transform_6(%arg0: i32) -> (i32, i32) {
    %c0_i32 = arith.constant 0 : i32
    %c0_i32_0 = arith.constant 0 : i32
    %c0_i32_1 = arith.constant 0 : i32
    return %c0_i32, %c0_i32_0 : i32, i32
  }
  func.func @transform_7(%arg0: i32) -> (i32, i32) {
    %c0_i32 = arith.constant 0 : i32
    %c0_i32_0 = arith.constant 0 : i32
    return %arg0, %c0_i32 : i32, i32
  }
}

</mosaic_0001>

<llo_original>
// kernel: tpu_custom_call.1
$region0: #{tpu_custom_call.1}
  #allocation0 [shape = 'u32[]', space=smem, size = 0x4, offset = 0x4, fixed_abs, tag = 'smem constant byte address 0x4 - core index']
  #allocation1 [shape = 'u32[72,128]{1,0:T(1,128)}', space=vmem, size = 0x9000, scoped, tag = 'internal scratch']
  %s0 = inlined_call_operand.vmem [shape: f32[16,16], index: 0, kind: input, shape index: {}]
  %s1 = inlined_call_operand.vmem [shape: f32[16,8], index: 1, kind: input, shape index: {}]
  %s2 = inlined_call_operand.vmem [shape: f32[16,3], index: 2, kind: input, shape index: {}]
  %s3 = inlined_call_operand.hbm [shape: f32[16,384], index: 3, kind: input, shape index: {}]
  %s4 = inlined_call_operand.vmem [shape: f32[8,384], index: 4, kind: input, shape index: {}]
  %s5 = inlined_call_operand.hbm [shape: f32[3,384], index: 5, kind: input, shape index: {}]
  %s6 = inlined_call_operand.vmem [shape: f32[1,384], index: 6, kind: input, shape index: {}]
  %s7 = inlined_call_operand.hbm [shape: f32[16,128], index: 7, kind: output, shape index: {}]
  %s8 = sld [smem:[#allocation0]]
  $region46: #{tpu_custom_call.1} parent=0
    _
  %s10 = ssub.s32 1, %s8
  %s11 = scalar_select 0, %s10, %s8
  $region1: #{tpu_custom_call.1} parent=0
    #allocation2 [shape = 'u8[24576]{0}', space=vmem, size = 0x6000, scoped, tag = 'input window, operand 3, single buffered']
    #allocation3 [shape = 's32[1]{0}', space=sflag, size = 0x4, scoped, tag = 'scoped memory for tpu_custom_call.1']
    #allocation4 [shape = 's32[1]{0}', space=sflag, size = 0x4, scoped, tag = 'scoped memory for tpu_custom_call.1']
    #allocation5 [shape = 'u8[6144]{0}', space=vmem, size = 0x1800, scoped, tag = 'input window, operand 5, single buffered']
    #allocation6 [shape = 's32[1]{0}', space=sflag, size = 0x4, scoped, tag = 'scoped memory for tpu_custom_call.1']
    #allocation7 [shape = 'u8[8192]{0}', space=vmem, size = 0x2000, scoped, tag = 'output window, operand 0, single buffered']
    %12 = vsyncpa [#allocation3], 0
    %13 = vsyncpa [#allocation6], 0
    %14 = vsyncpa [#allocation4], 0
    // Predicated region
    $region2: #{tpu_custom_call.1} parent=1 // pred_check
      _
    $region3: #{tpu_custom_call.1} parent=1 // pred_check_branch
      %16 = sbr.rel (0) target = $region5
    $region4: #{tpu_custom_call.1} parent=1 // pred_region
      _
    $region5: #{tpu_custom_call.1} parent=1 // pred_fallthru
      _
    // Predicated region
    $region6: #{tpu_custom_call.1} parent=1 // pred_check
      _
    $region7: #{tpu_custom_call.1} parent=1 // pred_check_branch
      %18 = sbr.rel (0) target = $region9
    $region8: #{tpu_custom_call.1} parent=1 // pred_region
      _
    $region9: #{tpu_custom_call.1} parent=1 // pred_fallthru
      _
    // Predicated region
    $region10: #{tpu_custom_call.1} parent=1 // pred_check
      _
    $region11: #{tpu_custom_call.1} parent=1 // pred_check_branch
      %20 = sbr.rel (0) target = $region13
    $region12: #{tpu_custom_call.1} parent=1 // pred_region
      _
    $region13: #{tpu_custom_call.1} parent=1 // pred_fallthru
      _
    // Predicated region
    $region14: #{tpu_custom_call.1} parent=1 // pred_check
      _
    $region15: #{tpu_custom_call.1} parent=1 // pred_check_branch
      %22 = sbr.rel (0) target = $region17
    $region16: #{tpu_custom_call.1} parent=1 // pred_region
      %24 = vsyncadd [#allocation3], 0
      %s25 = sshll.u32 %s3, 4
      %s26 = int_to_ptr.hbm [resolvable:$true] %s25
      %s27 = sshll.u32 [#allocation2], 4
      %s28 = int_to_ptr.vmem [resolvable:$true] %s27
      %33 = dma.hbm_to_vmem [thread:$0]  %s26, 768, %s28, [#allocation3], 384, 384, 24
    $region17: #{tpu_custom_call.1} parent=1 // pred_fallthru
      _
    // Predicated region
    $region18: #{tpu_custom_call.1} parent=1 // pred_check
      _
    $region19: #{tpu_custom_call.1} parent=1 // pred_check_branch
      %35 = sbr.rel (0) target = $region21
    $region20: #{tpu_custom_call.1} parent=1 // pred_region
      _
    $region21: #{tpu_custom_call.1} parent=1 // pred_fallthru
      _
    // Predicated region
    $region22: #{tpu_custom_call.1} parent=1 // pred_check
      _
    $region23: #{tpu_custom_call.1} parent=1 // pred_check_branch
      %37 = sbr.rel (0) target = $region25
    $region24: #{tpu_custom_call.1} parent=1 // pred_region
      %39 = vsyncadd [#allocation6], 0
      %s41 = sshll.u32 %s5, 4
      %s42 = int_to_ptr.hbm [resolvable:$true] %s41
      %s43 = sshll.u32 [#allocation5], 4
      %s44 = int_to_ptr.vmem [resolvable:$true] %s43
      %46 = dma.hbm_to_vmem [thread:$0]  %s42, 192, %s44, [#allocation6]
    $region25: #{tpu_custom_call.1} parent=1 // pred_fallthru
      _
    // Predicated region
    $region26: #{tpu_custom_call.1} parent=1 // pred_check
      _
    $region27: #{tpu_custom_call.1} parent=1 // pred_check_branch
      %48 = sbr.rel (0) target = $region29
    $region28: #{tpu_custom_call.1} parent=1 // pred_region
      _
    $region29: #{tpu_custom_call.1} parent=1 // pred_fallthru
      _
    // Predicated region
    $region30: #{tpu_custom_call.1} parent=1 // pred_check
      _
    $region31: #{tpu_custom_call.1} parent=1 // pred_check_branch
      %50 = sbr.rel (0) target = $region33
    $region32: #{tpu_custom_call.1} parent=1 // pred_region
      %52 = dma.done [#allocation3], 768
    $region33: #{tpu_custom_call.1} parent=1 // pred_fallthru
      _
    // Predicated region
    $region34: #{tpu_custom_call.1} parent=1 // pred_check
      _
    $region35: #{tpu_custom_call.1} parent=1 // pred_check_branch
      %54 = sbr.rel (0) target = $region37
    $region36: #{tpu_custom_call.1} parent=1 // pred_region
      %56 = dma.done [#allocation6], 192
    $region37: #{tpu_custom_call.1} parent=1 // pred_fallthru
      _
    %v57 = vld [vmem:[%s0] sm:$0xff]
    %v58 = vld [vmem:[%s0 + $0x8] sm:$0xff]
    %v59 = vld [vmem:[#allocation2] sm:$0xff]
    %v60 = vld [vmem:[#allocation2 + $0x8] sm:$0xff]
    %v61 = vld [vmem:[#allocation2 + $0x10] sm:$0xff]
    %v62 = vld [vmem:[#allocation2 + $0x18] sm:$0xff]
    %v63 = vld [vmem:[#allocation2 + $0x20] sm:$0xff]
    %v64 = vld [vmem:[#allocation2 + $0x28] sm:$0xff]
    %v65 = vld [vmem:[%s1] sm:$0xff]
    %v66 = vld [vmem:[%s1 + $0x8] sm:$0xff]
    %v67 = vld [vmem:[%s4] sm:$0xff]
    %v68 = vld [vmem:[%s4 + $0x8] sm:$0xff]
    %v69 = vld [vmem:[%s4 + $0x10] sm:$0xff]
    %vm70 = vcmask 64512
    %v72 = vsel %vm70, %v65, 0
    %v75 = vsel %vm70, %v66, 0
    %77 = vmatpush.msra.mxu0 0.0
    %78 = vmatpush.msra.mxu0 0.0
    %79 = vmatpush.msra.mxu0 0.0
    %80 = vmatpush.msra.mxu0 0.0
    %81 = vmatpush.msra.mxu0 0.0
    %82 = vmatpush.msra.mxu0 0.0
    %83 = vmatpush.msra.mxu0 0.0
    %84 = vmatpush.msra.mxu0 0.0
    %85 = vmatpush.msra.mxu0 0.0
    %86 = vmatpush.msra.mxu0 0.0
    %87 = vmatpush.msra.mxu0 0.0
    %88 = vmatpush.msra.mxu0 0.0
    %89 = vmatpush.msra.mxu0 0.0
    %90 = vmatpush.msra.mxu0 0.0
    %91 = vmatpush.msra.mxu0 0.0
    %92 = vmatpush.msra.mxu0 %v67
    %93 = vmatmul.f32.gmra.mxu0 %v72
    %v94 = vpop.f32.mrf.mxu0
    %v95 = vadd.f32 0.0, %v94
    %96 = vmatmul.f32.gmra.mxu0 %v75
    %v97 = vpop.f32.mrf.mxu0
    %v98 = vadd.f32 0.0, %v97
    %99 = vdwg.mxu0
    %100 = vmatpush.msra.mxu0 0.0
    %101 = vmatpush.msra.mxu0 0.0
    %102 = vmatpush.msra.mxu0 0.0
    %103 = vmatpush.msra.mxu0 0.0
    %104 = vmatpush.msra.mxu0 0.0
    %105 = vmatpush.msra.mxu0 0.0
    %106 = vmatpush.msra.mxu0 0.0
    %107 = vmatpush.msra.mxu0 0.0
    %108 = vmatpush.msra.mxu0 0.0
    %109 = vmatpush.msra.mxu0 0.0
    %110 = vmatpush.msra.mxu0 0.0
    %111 = vmatpush.msra.mxu0 0.0
    %112 = vmatpush.msra.mxu0 0.0
    %113 = vmatpush.msra.mxu0 0.0
    %114 = vmatpush.msra.mxu0 0.0
    %115 = vmatpush.msra.mxu0 %v68
    %116 = vmatmul.f32.gmra.mxu0 %v72
    %v117 = vpop.f32.mrf.mxu0
    %v118 = vadd.f32 0.0, %v117
    %119 = vmatmul.f32.gmra.mxu0 %v75
    %v120 = vpop.f32.mrf.mxu0
    %v121 = vadd.f32 0.0, %v120
    %122 = vdwg.mxu0
    %123 = vmatpush.msra.mxu0 0.0
    %124 = vmatpush.msra.mxu0 0.0
    %125 = vmatpush.msra.mxu0 0.0
    %126 = vmatpush.msra.mxu0 0.0
    %127 = vmatpush.msra.mxu0 0.0
    %128 = vmatpush.msra.mxu0 0.0
    %129 = vmatpush.msra.mxu0 0.0
    %130 = vmatpush.msra.mxu0 0.0
    %131 = vmatpush.msra.mxu0 0.0
    %132 = vmatpush.msra.mxu0 0.0
    %133 = vmatpush.msra.mxu0 0.0
    %134 = vmatpush.msra.mxu0 0.0
    %135 = vmatpush.msra.mxu0 0.0
    %136 = vmatpush.msra.mxu0 0.0
    %137 = vmatpush.msra.mxu0 0.0
    %138 = vmatpush.msra.mxu0 %v69
    %139 = vmatmul.f32.gmra.mxu0 %v72
    %v140 = vpop.f32.mrf.mxu0
    %v141 = vadd.f32 0.0, %v140
    %142 = vmatmul.f32.gmra.mxu0 %v75
    %v143 = vpop.f32.mrf.mxu0
    %v144 = vadd.f32 0.0, %v143
    %145 = vdwg.mxu0
    %vm146 = vcmask 130048
    %v148 = vsel %vm146, %v57, 0
    %v151 = vsel %vm146, %v58, 0
    %153 = vmatpush.msra.mxu0 0.0
    %154 = vmatpush.msra.mxu0 0.0
    %155 = vmatpush.msra.mxu0 0.0
    %156 = vmatpush.msra.mxu0 0.0
    %157 = vmatpush.msra.mxu0 0.0
    %158 = vmatpush.msra.mxu0 0.0
    %159 = vmatpush.msra.mxu0 0.0
    %160 = vmatpush.msra.mxu0 0.0
    %161 = vmatpush.msra.mxu0 0.0
    %162 = vmatpush.msra.mxu0 0.0
    %163 = vmatpush.msra.mxu0 0.0
    %164 = vmatpush.msra.mxu0 0.0
    %165 = vmatpush.msra.mxu0 0.0
    %166 = vmatpush.msra.mxu0 0.0
    %167 = vmatpush.msra.mxu0 %v62
    %168 = vmatpush.msra.mxu0 %v59
    %169 = vmatmul.f32.gmra.mxu0 %v148
    %v170 = vpop.f32.mrf.mxu0
    %v171 = vadd.f32 %v95, %v170
    %172 = vmatmul.f32.gmra.mxu0 %v151
    %v173 = vpop.f32.mrf.mxu0
    %v174 = vadd.f32 %v98, %v173
    %175 = vdwg.mxu0
    %176 = vmatpush.msra.mxu0 0.0
    %177 = vmatpush.msra.mxu0 0.0
    %178 = vmatpush.msra.mxu0 0.0
    %179 = vmatpush.msra.mxu0 0.0
    %180 = vmatpush.msra.mxu0 0.0
    %181 = vmatpush.msra.mxu0 0.0
    %182 = vmatpush.msra.mxu0 0.0
    %183 = vmatpush.msra.mxu0 0.0
    %184 = vmatpush.msra.mxu0 0.0
    %185 = vmatpush.msra.mxu0 0.0
    %186 = vmatpush.msra.mxu0 0.0
    %187 = vmatpush.msra.mxu0 0.0
    %188 = vmatpush.msra.mxu0 0.0
    %189 = vmatpush.msra.mxu0 0.0
    %190 = vmatpush.msra.mxu0 %v63
    %191 = vmatpush.msra.mxu0 %v60
    %192 = vmatmul.f32.gmra.mxu0 %v148
    %v193 = vpop.f32.mrf.mxu0
    %v194 = vadd.f32 %v118, %v193
    %195 = vmatmul.f32.gmra.mxu0 %v151
    %v196 = vpop.f32.mrf.mxu0
    %v197 = vadd.f32 %v121, %v196
    %198 = vdwg.mxu0
    %199 = vmatpush.msra.mxu0 0.0
    %200 = vmatpush.msra.mxu0 0.0
    %201 = vmatpush.msra.mxu0 0.0
    %202 = vmatpush.msra.mxu0 0.0
    %203 = vmatpush.msra.mxu0 0.0
    %204 = vmatpush.msra.mxu0 0.0
    %205 = vmatpush.msra.mxu0 0.0
    %206 = vmatpush.msra.mxu0 0.0
    %207 = vmatpush.msra.mxu0 0.0
    %208 = vmatpush.msra.mxu0 0.0
    %209 = vmatpush.msra.mxu0 0.0
    %210 = vmatpush.msra.mxu0 0.0
    %211 = vmatpush.msra.mxu0 0.0
    %212 = vmatpush.msra.mxu0 0.0
    %213 = vmatpush.msra.mxu0 %v64
    %214 = vmatpush.msra.mxu0 %v61
    %215 = vmatmul.f32.gmra.mxu0 %v148
    %v216 = vpop.f32.mrf.mxu0
    %v217 = vadd.f32 %v141, %v216
    %218 = vmatmul.f32.gmra.mxu0 %v151
    %v219 = vpop.f32.mrf.mxu0
    %v220 = vadd.f32 %v144, %v219
    %221 = vdwg.mxu0
    %v222 = vld [vmem:[%s2] sm:$0xff]
    %v223 = vld [vmem:[%s2 + $0x8] sm:$0xff]
    %v224 = vld [vmem:[#allocation5] sm:$0x77]
    %v225 = vld [vmem:[#allocation5 + $0x8] sm:$0x7]
    %228 = vst [vmem:[#allocation1] ss:$2 sm:$0xff] %v224
    %s229 = scalar_lea.vmem [#allocation1], 16
    %230 = vst [vmem:[%s229] ss:$2 sm:$0xff] %v225
    %v231 = vld.sshfl [vmem:[#allocation1] sm:$0xff pattern:$0x75316420]
    %v232 = vld.sshfl [vmem:[#allocation1 + $0x8] sm:$0xff pattern:$0x75316420]
    %v233 = vld.sshfl [vmem:[#allocation1 + $0x10] sm:$0xff pattern:$0x75316420]
    %vm234 = vcmask 23552
    %v236 = vsel %vm234, %v222, 0
    %v239 = vsel %vm234, %v223, 0
    %vm241 = vcmask 1042432
    %v242 = vsel %vm241, %v231, 0
    %v244 = vsel %vm241, %v232, 0
    %v246 = vsel %vm241, %v233, 0
    %248 = vmatpush.msra.mxu0 0.0
    %249 = vmatpush.msra.mxu0 0.0
    %250 = vmatpush.msra.mxu0 0.0
    %251 = vmatpush.msra.mxu0 0.0
    %252 = vmatpush.msra.mxu0 0.0
    %253 = vmatpush.msra.mxu0 0.0
    %254 = vmatpush.msra.mxu0 0.0
    %255 = vmatpush.msra.mxu0 0.0
    %256 = vmatpush.msra.mxu0 0.0
    %257 = vmatpush.msra.mxu0 0.0
    %258 = vmatpush.msra.mxu0 0.0
    %259 = vmatpush.msra.mxu0 0.0
    %260 = vmatpush.msra.mxu0 0.0
    %261 = vmatpush.msra.mxu0 0.0
    %262 = vmatpush.msra.mxu0 0.0
    %263 = vmatpush.msra.mxu0 %v242
    %264 = vmatmul.f32.gmra.mxu0 %v236
    %v265 = vpop.f32.mrf.mxu0
    %v266 = vadd.f32 0.0, %v265
    %267 = vmatmul.f32.gmra.mxu0 %v239
    %v268 = vpop.f32.mrf.mxu0
    %v269 = vadd.f32 0.0, %v268
    %270 = vdwg.mxu0
    %271 = vmatpush.msra.mxu0 0.0
    %272 = vmatpush.msra.mxu0 0.0
    %273 = vmatpush.msra.mxu0 0.0
    %274 = vmatpush.msra.mxu0 0.0
    %275 = vmatpush.msra.mxu0 0.0
    %276 = vmatpush.msra.mxu0 0.0
    %277 = vmatpush.msra.mxu0 0.0
    %278 = vmatpush.msra.mxu0 0.0
    %279 = vmatpush.msra.mxu0 0.0
    %280 = vmatpush.msra.mxu0 0.0
    %281 = vmatpush.msra.mxu0 0.0
    %282 = vmatpush.msra.mxu0 0.0
    %283 = vmatpush.msra.mxu0 0.0
    %284 = vmatpush.msra.mxu0 0.0
    %285 = vmatpush.msra.mxu0 0.0
    %286 = vmatpush.msra.mxu0 %v244
    %287 = vmatmul.f32.gmra.mxu0 %v236
    %v288 = vpop.f32.mrf.mxu0
    %v289 = vadd.f32 0.0, %v288
    %290 = vmatmul.f32.gmra.mxu0 %v239
    %v291 = vpop.f32.mrf.mxu0
    %v292 = vadd.f32 0.0, %v291
    %293 = vdwg.mxu0
    %294 = vmatpush.msra.mxu0 0.0
    %295 = vmatpush.msra.mxu0 0.0
    %296 = vmatpush.msra.mxu0 0.0
    %297 = vmatpush.msra.mxu0 0.0
    %298 = vmatpush.msra.mxu0 0.0
    %299 = vmatpush.msra.mxu0 0.0
    %300 = vmatpush.msra.mxu0 0.0
    %301 = vmatpush.msra.mxu0 0.0
    %302 = vmatpush.msra.mxu0 0.0
    %303 = vmatpush.msra.mxu0 0.0
    %304 = vmatpush.msra.mxu0 0.0
    %305 = vmatpush.msra.mxu0 0.0
    %306 = vmatpush.msra.mxu0 0.0
    %307 = vmatpush.msra.mxu0 0.0
    %308 = vmatpush.msra.mxu0 0.0
    %309 = vmatpush.msra.mxu0 %v246
    %310 = vmatmul.f32.gmra.mxu0 %v236
    %v311 = vpop.f32.mrf.mxu0
    %v312 = vadd.f32 0.0, %v311
    %313 = vmatmul.f32.gmra.mxu0 %v239
    %v314 = vpop.f32.mrf.mxu0
    %v315 = vadd.f32 0.0, %v314
    %316 = vdwg.mxu0
    %v317 = vadd.f32 %v171, %v266
    %v318 = vadd.f32 %v194, %v289
    %v319 = vadd.f32 %v217, %v312
    %v320 = vadd.f32 %v174, %v269
    %v321 = vadd.f32 %v197, %v292
    %v322 = vadd.f32 %v220, %v315
    %v323 = vld [vmem:[%s6] sm:$0x7]
    %v325 = vperm.slane %v323, 0
    %v326 = vperm.slane %v323, 1
    %v327 = vperm.slane %v323, 2
    %v331 = vadd.f32 %v317, %v325
    %v332 = vadd.f32 %v318, %v326
    %v333 = vadd.f32 %v319, %v327
    %v334 = vadd.f32 %v320, %v325
    %v335 = vadd.f32 %v321, %v326
    %v336 = vadd.f32 %v322, %v327
    %v337 = vxor.u32 %v333, 2147483648
    %v338 = vxor.u32 %v336, 2147483648
    %v339 = vmul.f32 %v337, 1.442695
    %v340 = vpow.pop %v339
    %v341 = vmul.f32 %v338, 1.442695
    %v342 = vpow.pop %v341
    %v343 = vadd.f32 %v340, 1.0
    %v344 = vadd.f32 %v342, 1.0
    %v345 = vrcp.pop %v343
    %v346 = vmul.f32 %v343, %v345
    %v347 = vsub.f32 1.0, %v346
    %v348 = vmul.f32 %v345, %v347
    %v349 = vadd.f32 %v345, %v348
    %vm350 = vweird.f32 %v343
    %vm351 = vweird.f32 %v345
    %vm352 = vmor %vm350, %vm351
    %v353 = vsel %vm352, %v345, %v349
    %v354 = vand.u32 2147483647, %v343
    %vm355 = vcmp.eq.f32.partialorder %v354, 8.507059e+37
    %v356 = vand.u32 %v343, 2147483648
    %v357 = vor.u32 1.1754944e-38, %v356
    %v358 = vsel %vm355, %v357, %v353
    %v359 = vmul.f32 1.0, %v358
    %v360 = vrcp.pop %v344
    %v361 = vmul.f32 %v344, %v360
    %v362 = vsub.f32 1.0, %v361
    %v363 = vmul.f32 %v360, %v362
    %v364 = vadd.f32 %v360, %v363
    %vm365 = vweird.f32 %v344
    %vm366 = vweird.f32 %v360
    %vm367 = vmor %vm365, %vm366
    %v368 = vsel %vm367, %v360, %v364
    %v369 = vand.u32 2147483647, %v344
    %vm370 = vcmp.eq.f32.partialorder %v369, 8.507059e+37
    %v371 = vand.u32 %v344, 2147483648
    %v372 = vor.u32 1.1754944e-38, %v371
    %v373 = vsel %vm370, %v372, %v368
    %v374 = vmul.f32 1.0, %v373
    %v375 = vsub.f32 %v331, %v332
    %v376 = vsub.f32 %v334, %v335
    %v377 = vmul.f32 %v375, %v359
    %v378 = vmul.f32 %v376, %v374
    %v379 = vadd.f32 %v332, %v377
    %v380 = vadd.f32 %v335, %v378
    %381 = vst [vmem:[#allocation7] sm:$0xff] %v379
    %382 = vst [vmem:[#allocation7 + $0x8] sm:$0xff] %v380
    // Predicated region
    $region38: #{tpu_custom_call.1} parent=1 // pred_check
      _
    $region39: #{tpu_custom_call.1} parent=1 // pred_check_branch
      %384 = sbr.rel (0) target = $region41
    $region40: #{tpu_custom_call.1} parent=1 // pred_region
      %386 = vsyncadd [#allocation4], 0
      %s387 = sshll.u32 [#allocation7], 4
      %s388 = int_to_ptr.vmem [resolvable:$true] %s387
      %s389 = sshll.u32 %s7, 4
      %s390 = int_to_ptr.hbm [resolvable:$true] %s389
      %395 = dma.vmem_to_hbm [thread:$0]  %s388, 256, %s390, [#allocation4], 128, 128, 8
    $region41: #{tpu_custom_call.1} parent=1 // pred_fallthru
      _
    // Predicated region
    $region42: #{tpu_custom_call.1} parent=1 // pred_check
      _
    $region43: #{tpu_custom_call.1} parent=1 // pred_check_branch
      %397 = sbr.rel (0) target = $region45
    $region44: #{tpu_custom_call.1} parent=1 // pred_region
      %399 = dma.done [#allocation4], 256
    $region45: #{tpu_custom_call.1} parent=1 // pred_fallthru
      _
    %400 = vsyncpa [#allocation3], 1
    %401 = vsyncpa [#allocation6], 1
    %402 = vsyncpa [#allocation4], 1

</llo_original>
